<compile_context>
chip_gen: v7x
topology: tpu7x:2x2x1
jax: 0.10.0
libtpu: 0.0.40
codegen_flags: <defaults>
</compile_context>

<pallas_src>
import functools

import jax
import jax.numpy as jnp
from jax import lax
from jax.experimental import pallas as pl
from jax.experimental.pallas import tpu as pltpu


def _stable_softplus(z):
    # softplus(z) = max(z, 0) + log(1 + exp(-|z|)); overflow-free, same EUP cost.
    return jnp.maximum(z, 0.0) + jnp.log(1.0 + jnp.exp(-jnp.abs(z)))


def _wsml_tile_kernel(sat_i_ref, grd_j_ref, grd_i_ref, sat_j_ref, out_ref,
                      *, loss_weight):
    j = pl.program_id(1)

    @pl.when(j == 0)
    def _():
        out_ref[...] = jnp.zeros_like(out_ref)

    sat_i = sat_i_ref[...]          # [TM, D] native dtype (bf16 stays bf16)
    grd_j = grd_j_ref[...]          # [TN, D]

    # sim tile [TM, TN]: contract on dim 1 of both operands (no transpose),
    # f32 accumulation on the MXU regardless of the input dtype.
    sim = lax.dot_general(
        sat_i, grd_j,
        dimension_numbers=(((1,), (1,)), ((), ())),
        preferred_element_type=jnp.float32)

    # Positive similarities (diagonal of the global sim matrix) via row-wise
    # dots: O(T*D) VPU work, accumulated in f32.
    sat_i_f = sat_i.astype(jnp.float32)
    grd_i_f = grd_i_ref[...].astype(jnp.float32)
    sat_j_f = sat_j_ref[...].astype(jnp.float32)
    grd_j_f = grd_j.astype(jnp.float32)
    pos_row = jnp.sum(sat_i_f * grd_i_f, axis=-1, keepdims=True)    # [TM, 1]
    pos_col = jnp.sum(sat_j_f * grd_j_f, axis=-1)[None, :]          # [1, TN]

    # pos_dist - dist == 2 * (sim - pos_sim); `dist` itself never materialized.
    w2 = jnp.float32(2.0 * loss_weight)
    g2s_part = jnp.sum(_stable_softplus(w2 * (sim - pos_col)))
    s2g_part = jnp.sum(_stable_softplus(w2 * (sim - pos_row)))
    sim_part = jnp.sum(sim)
    # Diagonal (positive-pair) contribution counted once per row block (j == 0).
    pos_part = jnp.where(j == 0, jnp.sum(pos_row), 0.0)

    # Lane-dense (1, 1, 128) partial-sum slab: lanes 0..3 hold the 4 partials.
    lane = lax.broadcasted_iota(jnp.int32, out_ref.shape, 2)
    upd = (jnp.where(lane == 0, g2s_part, 0.0)
           + jnp.where(lane == 1, s2g_part, 0.0)
           + jnp.where(lane == 2, sim_part, 0.0)
           + jnp.where(lane == 3, pos_part, 0.0))
    out_ref[...] += upd.astype(jnp.float32)


def _pick_tile(b):
    for t in (512, 256, 128):
        if b % t == 0:
            return t
    return b  # full extent (always legal as a block dim)


def weighted_soft_margin_loss(sat_global, grd_global, mini_batch,
                              loss_weight=10.0, batch_hard_count=0,
                              tm=None, tn=None):
    # TODO(synk): batch_hard_count > 0 branch (torch.topk hard-negative mining)
    # is not implemented.
    assert batch_hard_count == 0, "batch_hard_count > 0 (top-k) not implemented"
    b, d = sat_global.shape
    assert grd_global.shape == (b, d)

    tm = _pick_tile(b) if tm is None else tm
    tn = _pick_tile(b) if tn is None else tn
    assert b % tm == 0 and b % tn == 0, (b, tm, tn)
    gi, gj = b // tm, b // tn

    kernel = functools.partial(_wsml_tile_kernel, loss_weight=float(loss_weight))

    parts = pl.pallas_call(
        kernel,
        out_shape=jax.ShapeDtypeStruct((gi, 1, 128), jnp.float32),
        grid=(gi, gj),
        in_specs=[
            pl.BlockSpec((tm, d), lambda i, j: (i, 0)),  # sat rows (row block)
            pl.BlockSpec((tn, d), lambda i, j: (j, 0)),  # grd rows (col block)
            pl.BlockSpec((tm, d), lambda i, j: (i, 0)),  # grd rows (row block, pos_row)
            pl.BlockSpec((tn, d), lambda i, j: (j, 0)),  # sat rows (col block, pos_col)
        ],
        out_specs=pl.BlockSpec((1, 1, 128), lambda i, j: (i, 0, 0)),
        compiler_params=pltpu.CompilerParams(
            dimension_semantics=("parallel", "arbitrary")),
    )(sat_global, grd_global, grd_global, sat_global)

    # Tiny final reduction / normalization in plain JAX.
    g2s_sum = jnp.sum(parts[:, 0, 0])
    s2g_sum = jnp.sum(parts[:, 0, 1])
    sim_sum = jnp.sum(parts[:, 0, 2])
    pos_sum = jnp.sum(parts[:, 0, 3])

    pair_n = jnp.float32(mini_batch) * (jnp.float32(mini_batch) - 1.0)
    loss = (g2s_sum + s2g_sum) / pair_n * 0.5
    pos_dist_avg = 2.0 - 2.0 * pos_sum / jnp.float32(b)
    nega_dist_avg = 2.0 - 2.0 * sim_sum / jnp.float32(b * b)
    return loss, pos_dist_avg, nega_dist_avg


def _reference(sat, grd, mini_batch, loss_weight=10.0):
    """Pure-JAX reference mirroring the PyTorch forward (batch_hard_count=0)."""
    dist = 2.0 - 2.0 * sat @ grd.T
    pos = jnp.diagonal(dist)
    pair_n = mini_batch * (mini_batch - 1.0)
    g2s = jnp.sum(jnp.log(1.0 + jnp.exp((pos[None, :] - dist) * loss_weight))) / pair_n
    s2g = jnp.sum(jnp.log(1.0 + jnp.exp((pos[:, None] - dist) * loss_weight))) / pair_n
    return (g2s + s2g) / 2.0, pos.mean(), dist.mean()


if __name__ == "__main__":
    def make_inputs(key, b, d):
        k1, k2 = jax.random.split(key)
        sat = jax.random.normal(k1, (b, d), dtype=jnp.float32)
        grd = jax.random.normal(k2, (b, d), dtype=jnp.float32)
        sat = sat / jnp.linalg.norm(sat, axis=-1, keepdims=True)
        grd = grd / jnp.linalg.norm(grd, axis=-1, keepdims=True)
        return sat, grd

    # Small single-tile case (grid = (1, 1)).
    sat, grd = make_inputs(jax.random.PRNGKey(0), 8, 32)
    loss, pos_avg, nega_avg = weighted_soft_margin_loss(sat, grd, 8.0)
    jax.block_until_ready((loss, pos_avg, nega_avg))
    rl, rp, rn = _reference(sat, grd, 8.0)
    assert jnp.allclose(loss, rl, rtol=1e-5, atol=1e-5), (loss, rl)
    assert jnp.allclose(pos_avg, rp, rtol=1e-5, atol=1e-5), (pos_avg, rp)
    assert jnp.allclose(nega_avg, rn, rtol=1e-5, atol=1e-5), (nega_avg, rn)

    # Multi-tile case: exercises the (parallel row-tile) x (arbitrary col-tile)
    # grid and the running-sum accumulation (grid = (2, 2)).
    sat2, grd2 = make_inputs(jax.random.PRNGKey(1), 256, 64)
    loss2, pos2, nega2 = weighted_soft_margin_loss(sat2, grd2, 256.0, tm=128, tn=128)
    jax.block_until_ready((loss2, pos2, nega2))
    rl2, rp2, rn2 = _reference(sat2, grd2, 256.0)
    assert jnp.allclose(loss2, rl2, rtol=1e-4, atol=1e-4), (loss2, rl2)
    assert jnp.allclose(pos2, rp2, rtol=1e-4, atol=1e-4), (pos2, rp2)
    assert jnp.allclose(nega2, rn2, rtol=1e-4, atol=1e-4), (nega2, rn2)

    print("KERNEL_OK")
</pallas_src>

<mosaic_0001>
module attributes {stable_mosaic.version = 11 : i64} {
  func.func @_wsml_tile_kernel(%arg0: i32, %arg1: i32, %arg2: memref<8x32xf32, #tpu.memory_space<vmem>>, %arg3: memref<8x32xf32, #tpu.memory_space<vmem>>, %arg4: memref<8x32xf32, #tpu.memory_space<vmem>>, %arg5: memref<8x32xf32, #tpu.memory_space<vmem>>, %arg6: memref<1x1x128xf32, #tpu.memory_space<vmem>>) attributes {dimension_semantics = [#tpu.dimension_semantics<parallel>, #tpu.dimension_semantics<arbitrary>], iteration_bounds = array<i64: 1, 1>, scalar_prefetch = 0 : i64, scratch_operands = 0 : i64, tpu.core_type = #tpu.core_type<tc>, window_params = [{transform_indices = @transform_0, window_bounds = array<i64: 8, 32>}, {transform_indices = @transform_1, window_bounds = array<i64: 8, 32>}, {transform_indices = @transform_2, window_bounds = array<i64: 8, 32>}, {transform_indices = @transform_3, window_bounds = array<i64: 8, 32>}, {transform_indices = @transform_4, window_bounds = array<i64: 1, 1, 128>}]} {
    %c0_i32 = arith.constant 0 : i32
    %0 = arith.cmpi eq, %arg1, %c0_i32 : i32
    %1 = arith.extui %0 : i1 to i32
    %c0_i32_0 = arith.constant 0 : i32
    %2 = arith.cmpi ne, %1, %c0_i32_0 : i32
    scf.if %2 {
      %cst_35 = arith.constant 0.000000e+00 : f32
      %87 = vector.broadcast %cst_35 : f32 to vector<1x1x128xf32>
      %c0_36 = arith.constant 0 : index
      %c0_37 = arith.constant 0 : index
      %c0_38 = arith.constant 0 : index
      %88 = vector.load %arg6[%c0_36, %c0_37, %c0_38] : memref<1x1x128xf32, #tpu.memory_space<vmem>>, vector<1x1x128xf32>
      tpu.vector_store %arg6[%c0_36, %c0_37, %c0_38], %87 {strides = array<i32>} : memref<1x1x128xf32, #tpu.memory_space<vmem>>, vector<1x1x128xf32>,
    } else {
    }
    %c0 = arith.constant 0 : index
    %c0_1 = arith.constant 0 : index
    %3 = vector.load %arg2[%c0, %c0_1] : memref<8x32xf32, #tpu.memory_space<vmem>>, vector<8x32xf32>
    %c0_2 = arith.constant 0 : index
    %c0_3 = arith.constant 0 : index
    %4 = vector.load %arg3[%c0_2, %c0_3] : memref<8x32xf32, #tpu.memory_space<vmem>>, vector<8x32xf32>
    %cst = arith.constant dense<0.000000e+00> : vector<8x8xf32>
    %5 = tpu.matmul %3, %4, %cst {dimension_numbers = #tpu.dot_dimension_numbers<[1], [1], [0], [0], [0, 0, 1, 0], [], []>} : vector<8x32xf32>, vector<8x32xf32>, vector<8x8xf32> -> vector<8x8xf32>
    %c0_4 = arith.constant 0 : index
    %c0_5 = arith.constant 0 : index
    %6 = vector.load %arg4[%c0_4, %c0_5] : memref<8x32xf32, #tpu.memory_space<vmem>>, vector<8x32xf32>
    %c0_6 = arith.constant 0 : index
    %c0_7 = arith.constant 0 : index
    %7 = vector.load %arg5[%c0_6, %c0_7] : memref<8x32xf32, #tpu.memory_space<vmem>>, vector<8x32xf32>
    %8 = arith.mulf %3, %6 : vector<8x32xf32>
    %cst_8 = arith.constant dense<0.000000e+00> : vector<8xf32>
    %9 = vector.multi_reduction <add>, %8, %cst_8 [1] : vector<8x32xf32> to vector<8xf32>
    %10 = vector.shape_cast %9 : vector<8xf32> to vector<8x1xf32>
    %11 = arith.mulf %7, %4 : vector<8x32xf32>
    %cst_9 = arith.constant dense<0.000000e+00> : vector<8xf32>
    %12 = vector.multi_reduction <add>, %11, %cst_9 [1] : vector<8x32xf32> to vector<8xf32>
    %13 = vector.shape_cast %12 : vector<8xf32> to vector<1x8xf32>
    %14 = vector.broadcast %13 : vector<1x8xf32> to vector<8x8xf32>
    %15 = arith.subf %5, %14 : vector<8x8xf32>
    %cst_10 = arith.constant 2.000000e+01 : f32
    %16 = vector.broadcast %cst_10 : f32 to vector<8x8xf32>
    %17 = arith.mulf %16, %15 : vector<8x8xf32>
    %cst_11 = arith.constant 0.000000e+00 : f32
    %18 = vector.broadcast %cst_11 : f32 to vector<8x8xf32>
    %19 = arith.maximumf %17, %18 : vector<8x8xf32>
    %20 = math.absf %17 : vector<8x8xf32>
    %cst_12 = arith.constant 0.000000e+00 : f32
    %21 = vector.broadcast %cst_12 : f32 to vector<8x8xf32>
    %22 = arith.subf %21, %20 : vector<8x8xf32>
    %23 = math.exp %22 : vector<8x8xf32>
    %cst_13 = arith.constant 1.000000e+00 : f32
    %24 = vector.broadcast %cst_13 : f32 to vector<8x8xf32>
    %25 = arith.addf %24, %23 : vector<8x8xf32>
    %26 = math.log %25 : vector<8x8xf32>
    %27 = arith.addf %19, %26 : vector<8x8xf32>
    %28 = vector.shape_cast %27 : vector<8x8xf32> to vector<1x8x8xf32>
    %cst_14 = arith.constant dense<0.000000e+00> : vector<1xf32>
    %29 = vector.multi_reduction <add>, %28, %cst_14 [1, 2] : vector<1x8x8xf32> to vector<1xf32>
    %30 = vector.shape_cast %29 : vector<1xf32> to vector<1x1x1xf32>
    %31 = vector.extract %30[0, 0, 0] : f32 from vector<1x1x1xf32>
    %32 = vector.broadcast %10 : vector<8x1xf32> to vector<8x8xf32>
    %33 = arith.subf %5, %32 : vector<8x8xf32>
    %cst_15 = arith.constant 2.000000e+01 : f32
    %34 = vector.broadcast %cst_15 : f32 to vector<8x8xf32>
    %35 = arith.mulf %34, %33 : vector<8x8xf32>
    %cst_16 = arith.constant 0.000000e+00 : f32
    %36 = vector.broadcast %cst_16 : f32 to vector<8x8xf32>
    %37 = arith.maximumf %35, %36 : vector<8x8xf32>
    %38 = math.absf %35 : vector<8x8xf32>
    %cst_17 = arith.constant 0.000000e+00 : f32
    %39 = vector.broadcast %cst_17 : f32 to vector<8x8xf32>
    %40 = arith.subf %39, %38 : vector<8x8xf32>
    %41 = math.exp %40 : vector<8x8xf32>
    %cst_18 = arith.constant 1.000000e+00 : f32
    %42 = vector.broadcast %cst_18 : f32 to vector<8x8xf32>
    %43 = arith.addf %42, %41 : vector<8x8xf32>
    %44 = math.log %43 : vector<8x8xf32>
    %45 = arith.addf %37, %44 : vector<8x8xf32>
    %46 = vector.shape_cast %45 : vector<8x8xf32> to vector<1x8x8xf32>
    %cst_19 = arith.constant dense<0.000000e+00> : vector<1xf32>
    %47 = vector.multi_reduction <add>, %46, %cst_19 [1, 2] : vector<1x8x8xf32> to vector<1xf32>
    %48 = vector.shape_cast %47 : vector<1xf32> to vector<1x1x1xf32>
    %49 = vector.extract %48[0, 0, 0] : f32 from vector<1x1x1xf32>
    %50 = vector.shape_cast %5 : vector<8x8xf32> to vector<1x8x8xf32>
    %cst_20 = arith.constant dense<0.000000e+00> : vector<1xf32>
    %51 = vector.multi_reduction <add>, %50, %cst_20 [1, 2] : vector<1x8x8xf32> to vector<1xf32>
    %52 = vector.shape_cast %51 : vector<1xf32> to vector<1x1x1xf32>
    %53 = vector.extract %52[0, 0, 0] : f32 from vector<1x1x1xf32>
    %c0_i32_21 = arith.constant 0 : i32
    %54 = arith.cmpi eq, %arg1, %c0_i32_21 : i32
    %55 = vector.shape_cast %10 : vector<8x1xf32> to vector<1x8x1xf32>
    %cst_22 = arith.constant dense<0.000000e+00> : vector<1xf32>
    %56 = vector.multi_reduction <add>, %55, %cst_22 [1, 2] : vector<1x8x1xf32> to vector<1xf32>
    %57 = vector.shape_cast %56 : vector<1xf32> to vector<1x1x1xf32>
    %58 = vector.extract %57[0, 0, 0] : f32 from vector<1x1x1xf32>
    %cst_23 = arith.constant 0.000000e+00 : f32
    %59 = arith.select %54, %58, %cst_23 : f32
    %60 = tpu.iota {dimensions = array<i32: 2>} : vector<1x1x128xi32>
    %c0_i32_24 = arith.constant 0 : i32
    %61 = vector.broadcast %c0_i32_24 : i32 to vector<1x1x128xi32>
    %62 = arith.cmpi eq, %60, %61 : vector<1x1x128xi32>
    %cst_25 = arith.constant 0.000000e+00 : f32
    %63 = vector.broadcast %31 : f32 to vector<1x1x128xf32>
    %64 = vector.broadcast %cst_25 : f32 to vector<1x1x128xf32>
    %65 = arith.select %62, %63, %64 : vector<1x1x128xi1>, vector<1x1x128xf32>
    %c1_i32 = arith.constant 1 : i32
    %66 = vector.broadcast %c1_i32 : i32 to vector<1x1x128xi32>
    %67 = arith.cmpi eq, %60, %66 : vector<1x1x128xi32>
    %cst_26 = arith.constant 0.000000e+00 : f32
    %68 = vector.broadcast %49 : f32 to vector<1x1x128xf32>
    %69 = vector.broadcast %cst_26 : f32 to vector<1x1x128xf32>
    %70 = arith.select %67, %68, %69 : vector<1x1x128xi1>, vector<1x1x128xf32>
    %71 = arith.addf %65, %70 : vector<1x1x128xf32>
    %c2_i32 = arith.constant 2 : i32
    %72 = vector.broadcast %c2_i32 : i32 to vector<1x1x128xi32>
    %73 = arith.cmpi eq, %60, %72 : vector<1x1x128xi32>
    %cst_27 = arith.constant 0.000000e+00 : f32
    %74 = vector.broadcast %53 : f32 to vector<1x1x128xf32>
    %75 = vector.broadcast %cst_27 : f32 to vector<1x1x128xf32>
    %76 = arith.select %73, %74, %75 : vector<1x1x128xi1>, vector<1x1x128xf32>
    %77 = arith.addf %71, %76 : vector<1x1x128xf32>
    %c3_i32 = arith.constant 3 : i32
    %78 = vector.broadcast %c3_i32 : i32 to vector<1x1x128xi32>
    %79 = arith.cmpi eq, %60, %78 : vector<1x1x128xi32>
    %cst_28 = arith.constant 0.000000e+00 : f32
    %80 = vector.broadcast %59 : f32 to vector<1x1x128xf32>
    %81 = vector.broadcast %cst_28 : f32 to vector<1x1x128xf32>
    %82 = arith.select %79, %80, %81 : vector<1x1x128xi1>, vector<1x1x128xf32>
    %83 = arith.addf %77, %82 : vector<1x1x128xf32>
    %c0_29 = arith.constant 0 : index
    %c0_30 = arith.constant 0 : index
    %c0_31 = arith.constant 0 : index
    %84 = vector.load %arg6[%c0_29, %c0_30, %c0_31] : memref<1x1x128xf32, #tpu.memory_space<vmem>>, vector<1x1x128xf32>
    %85 = arith.addf %84, %83 : vector<1x1x128xf32>
    %c0_32 = arith.constant 0 : index
    %c0_33 = arith.constant 0 : index
    %c0_34 = arith.constant 0 : index
    %86 = vector.load %arg6[%c0_32, %c0_33, %c0_34] : memref<1x1x128xf32, #tpu.memory_space<vmem>>, vector<1x1x128xf32>
    tpu.vector_store %arg6[%c0_32, %c0_33, %c0_34], %85 {strides = array<i32>} : memref<1x1x128xf32, #tpu.memory_space<vmem>>, vector<1x1x128xf32>,
    return
  }
  func.func @transform_0(%arg0: i32, %arg1: i32) -> (i32, i32) {
    %c0_i32 = arith.constant 0 : i32
    %c0_i32_0 = arith.constant 0 : i32
    return %arg0, %c0_i32 : i32, i32
  }
  func.func @transform_1(%arg0: i32, %arg1: i32) -> (i32, i32) {
    %c0_i32 = arith.constant 0 : i32
    %c0_i32_0 = arith.constant 0 : i32
    return %arg1, %c0_i32 : i32, i32
  }
  func.func @transform_2(%arg0: i32, %arg1: i32) -> (i32, i32) {
    %c0_i32 = arith.constant 0 : i32
    %c0_i32_0 = arith.constant 0 : i32
    return %arg0, %c0_i32 : i32, i32
  }
  func.func @transform_3(%arg0: i32, %arg1: i32) -> (i32, i32) {
    %c0_i32 = arith.constant 0 : i32
    %c0_i32_0 = arith.constant 0 : i32
    return %arg1, %c0_i32 : i32, i32
  }
  func.func @transform_4(%arg0: i32, %arg1: i32) -> (i32, i32, i32) {
    %c0_i32 = arith.constant 0 : i32
    %c0_i32_0 = arith.constant 0 : i32
    %c0_i32_1 = arith.constant 0 : i32
    return %arg0, %c0_i32, %c0_i32_0 : i32, i32, i32
  }
}

</mosaic_0001>

<llo_original>
// kernel: tpu_custom_call.1
$region0: #{tpu_custom_call.1}
  #allocation0 [shape = 'u32[]', space=smem, size = 0x4, offset = 0x4, fixed_abs, tag = 'smem constant byte address 0x4 - core index']
  #allocation1 [shape = 'u32[144,128]{1,0:T(1,128)}', space=vmem, size = 0x12000, scoped, tag = 'internal scratch']
  %s0 = inlined_call_operand.hbm [shape: f32[8,32], index: 0, kind: input, shape index: {}]
  %s1 = inlined_call_operand.hbm [shape: f32[8,32], index: 1, kind: input, shape index: {}]
  %s2 = inlined_call_operand.hbm [shape: f32[8,32], index: 2, kind: input, shape index: {}]
  %s3 = inlined_call_operand.vmem [shape: f32[8,32], index: 3, kind: input, shape index: {}]
  %s4 = inlined_call_operand.hbm [shape: f32[1,1,128], index: 4, kind: output, shape index: {}]
  %s5 = sld [smem:[#allocation0]]
  $region42: #{tpu_custom_call.1} parent=0
    _
  %s7 = ssub.s32 1, %s5
  %s8 = scalar_select 0, %s7, %s5
  $region1: #{tpu_custom_call.1} parent=0
    #allocation2 [shape = 'u8[4096]{0}', space=vmem, size = 0x1000, scoped, tag = 'input window, operand 0, single buffered']
    #allocation3 [shape = 's32[1]{0}', space=sflag, size = 0x4, scoped, tag = 'scoped memory for tpu_custom_call.1']
    #allocation4 [shape = 's32[1]{0}', space=sflag, size = 0x4, scoped, tag = 'scoped memory for tpu_custom_call.1']
    #allocation5 [shape = 'u8[4096]{0}', space=vmem, size = 0x1000, scoped, tag = 'input window, operand 1, single buffered']
    #allocation6 [shape = 's32[1]{0}', space=sflag, size = 0x4, scoped, tag = 'scoped memory for tpu_custom_call.1']
    #allocation7 [shape = 'u8[4096]{0}', space=vmem, size = 0x1000, scoped, tag = 'input window, operand 2, single buffered']
    #allocation8 [shape = 'u8[512]{0}', space=vmem, size = 0x400, scoped, tag = 'output window, operand 0, single buffered']
    %9 = vsyncpa [#allocation3], 0
    %10 = vsyncpa [#allocation6], 0
    %11 = vsyncpa [#allocation4], 0
    // Predicated region
    $region2: #{tpu_custom_call.1} parent=1 // pred_check
      _
    $region3: #{tpu_custom_call.1} parent=1 // pred_check_branch
      %13 = sbr.rel (0) target = $region5
    $region4: #{tpu_custom_call.1} parent=1 // pred_region
      %s15 = ssub.s32 128, 128
      %16 = vsyncadd [#allocation3], %s15
      %s18 = sshll.u32 [#allocation2], 4
      %s19 = int_to_ptr.vmem [resolvable:$true] %s18
      %21 = dma.hbm_to_vmem [thread:$0]  %s0, 128, %s19, [#allocation3]
    $region5: #{tpu_custom_call.1} parent=1 // pred_fallthru
      _
    // Predicated region
    $region6: #{tpu_custom_call.1} parent=1 // pred_check
      _
    $region7: #{tpu_custom_call.1} parent=1 // pred_check_branch
      %23 = sbr.rel (0) target = $region9
    $region8: #{tpu_custom_call.1} parent=1 // pred_region
      %s25 = ssub.s32 128, 128
      %26 = vsyncadd [#allocation6], %s25
      %s28 = sshll.u32 [#allocation5], 4
      %s29 = int_to_ptr.vmem [resolvable:$true] %s28
      %31 = dma.hbm_to_vmem [thread:$0]  %s1, 128, %s29, [#allocation6]
    $region9: #{tpu_custom_call.1} parent=1 // pred_fallthru
      _
    // Predicated region
    $region10: #{tpu_custom_call.1} parent=1 // pred_check
      _
    $region11: #{tpu_custom_call.1} parent=1 // pred_check_branch
      %33 = sbr.rel (0) target = $region13
    $region12: #{tpu_custom_call.1} parent=1 // pred_region
      %s35 = ssub.s32 128, 128
      %36 = vsyncadd [#allocation6], %s35
      %s38 = sshll.u32 [#allocation7], 4
      %s39 = int_to_ptr.vmem [resolvable:$true] %s38
      %41 = dma.hbm_to_vmem [thread:$0]  %s2, 128, %s39, [#allocation6]
    $region13: #{tpu_custom_call.1} parent=1 // pred_fallthru
      _
    // Predicated region
    $region14: #{tpu_custom_call.1} parent=1 // pred_check
      _
    $region15: #{tpu_custom_call.1} parent=1 // pred_check_branch
      %43 = sbr.rel (0) target = $region17
    $region16: #{tpu_custom_call.1} parent=1 // pred_region
      _
    $region17: #{tpu_custom_call.1} parent=1 // pred_fallthru
      _
    // Predicated region
    $region18: #{tpu_custom_call.1} parent=1 // pred_check
      _
    $region19: #{tpu_custom_call.1} parent=1 // pred_check_branch
      %45 = sbr.rel (0) target = $region21
    $region20: #{tpu_custom_call.1} parent=1 // pred_region
      %46 = dma.done [#allocation3], 128
    $region21: #{tpu_custom_call.1} parent=1 // pred_fallthru
      _
    // Predicated region
    $region22: #{tpu_custom_call.1} parent=1 // pred_check
      _
    $region23: #{tpu_custom_call.1} parent=1 // pred_check_branch
      %48 = sbr.rel (0) target = $region25
    $region24: #{tpu_custom_call.1} parent=1 // pred_region
      %49 = dma.done [#allocation6], 128
    $region25: #{tpu_custom_call.1} parent=1 // pred_fallthru
      _
    // Predicated region
    $region26: #{tpu_custom_call.1} parent=1 // pred_check
      _
    $region27: #{tpu_custom_call.1} parent=1 // pred_check_branch
      %51 = sbr.rel (0) target = $region29
    $region28: #{tpu_custom_call.1} parent=1 // pred_region
      %52 = dma.done [#allocation6], 128
    $region29: #{tpu_custom_call.1} parent=1 // pred_fallthru
      _
    %p53 = scmp.eq.s32.totalorder 0, 0
    // Predicated region
    $region30: #{tpu_custom_call.1} parent=1 // pred_check
      %p54 = pneg %p53
    $region31: #{tpu_custom_call.1} parent=1 // pred_check_branch
      %56 = sbr.rel (%p54) target = $region33
    $region32: #{tpu_custom_call.1} parent=1 // pred_region
      %57 = vst [vmem:[#allocation8] sm:$0x1] 0.0
    $region33: #{tpu_custom_call.1} parent=1 // pred_fallthru
      _
    %v58 = vld [vmem:[#allocation2] sm:$0xff]
    %v59 = vld [vmem:[#allocation5] sm:$0xff]
    %vm60 = vcmask 261120
    %v62 = vsel %vm60, %v58, 0
    %v65 = vsel %vm60, %v59, 0
    %67 = vmatprep.subr.mxu0 0.0
    %68 = vmatpush1.xpose.msra.mxu0 %v65
    %69 = vmatprep.subr.mxu0 0.0
    %70 = vmatpush1.xpose.msra.mxu0 0.0
    %71 = vmatprep.subr.mxu0 0.0
    %72 = vmatpush1.xpose.msra.mxu0 0.0
    %73 = vmatprep.subr.mxu0 0.0
    %74 = vmatpush1.xpose.msra.mxu0 0.0
    %75 = vmatprep.subr.mxu0 0.0
    %76 = vmatpush1.xpose.msra.mxu0 0.0
    %77 = vmatprep.subr.mxu0 0.0
    %78 = vmatpush1.xpose.msra.mxu0 0.0
    %79 = vmatprep.subr.mxu0 0.0
    %80 = vmatpush1.xpose.msra.mxu0 0.0
    %81 = vmatprep.subr.mxu0 0.0
    %82 = vmatpush1.xpose.msra.mxu0 0.0
    %83 = vmatprep.subr.mxu0 0.0
    %84 = vmatpush1.xpose.msra.mxu0 0.0
    %85 = vmatprep.subr.mxu0 0.0
    %86 = vmatpush1.xpose.msra.mxu0 0.0
    %87 = vmatprep.subr.mxu0 0.0
    %88 = vmatpush1.xpose.msra.mxu0 0.0
    %89 = vmatprep.subr.mxu0 0.0
    %90 = vmatpush1.xpose.msra.mxu0 0.0
    %91 = vmatprep.subr.mxu0 0.0
    %92 = vmatpush1.xpose.msra.mxu0 0.0
    %93 = vmatprep.subr.mxu0 0.0
    %94 = vmatpush1.xpose.msra.mxu0 0.0
    %95 = vmatprep.subr.mxu0 0.0
    %96 = vmatpush1.xpose.msra.mxu0 0.0
    %97 = vmatprep.subr.mxu0 0.0
    %98 = vmatpush1.xpose.msra.mxu0 0.0
    %99 = vmatprep.subr.mxu0 0.0
    %100 = vmatpush1.xpose.msra.mxu0 0.0
    %101 = vmatprep.subr.mxu0 0.0
    %102 = vmatpush1.xpose.msra.mxu0 0.0
    %103 = vmatprep.subr.mxu0 0.0
    %104 = vmatpush1.xpose.msra.mxu0 0.0
    %105 = vmatprep.subr.mxu0 0.0
    %106 = vmatpush1.xpose.msra.mxu0 0.0
    %107 = vmatprep.subr.mxu0 0.0
    %108 = vmatpush1.xpose.msra.mxu0 0.0
    %109 = vmatprep.subr.mxu0 0.0
    %110 = vmatpush1.xpose.msra.mxu0 0.0
    %111 = vmatprep.subr.mxu0 0.0
    %112 = vmatpush1.xpose.msra.mxu0 0.0
    %113 = vmatprep.subr.mxu0 0.0
    %114 = vmatpush1.xpose.msra.mxu0 0.0
    %115 = vmatprep.subr.mxu0 0.0
    %116 = vmatpush1.xpose.msra.mxu0 0.0
    %117 = vmatprep.subr.mxu0 0.0
    %118 = vmatpush1.xpose.msra.mxu0 0.0
    %119 = vmatprep.subr.mxu0 0.0
    %120 = vmatpush1.xpose.msra.mxu0 0.0
    %121 = vmatprep.subr.mxu0 0.0
    %122 = vmatpush1.xpose.msra.mxu0 0.0
    %123 = vmatprep.subr.mxu0 0.0
    %124 = vmatpush1.xpose.msra.mxu0 0.0
    %125 = vmatprep.subr.mxu0 0.0
    %126 = vmatpush1.xpose.msra.mxu0 0.0
    %127 = vmatprep.subr.mxu0 0.0
    %128 = vmatpush1.xpose.msra.mxu0 0.0
    %129 = vmatprep.subr.mxu0 0.0
    %130 = vmatpush1.xpose.msra.mxu0 0.0
    %131 = vmatprep.mubr.f32.mxu0 0.0
    %132 = vmatmul.mubr.f32.gmra.mrb[0].mxu0 %v62
    %v133 = vpop.f32.mrb[0].mxu0
    %v134 = vadd.f32 0.0, %v133
    %v135 = vpop.f32.mrb[0].mxu0
    %136 = vdwg.mxu0
    %v137 = vld [vmem:[#allocation7] sm:$0xff]
    %v138 = vld [vmem:[%s3] sm:$0xff]
    %v139 = vmul.f32 %v58, %v137
    %v140 = vsel %vm60, %v139, 0.0
    %141 = vadd.xlane.f32.xlu0 %v140
    %v142 = vpop.xlane.xlu0 %141
    %v143 = vmul.f32 %v138, %v59
    %v144 = vsel %vm60, %v143, 0.0
    %145 = vadd.xlane.f32.xlu0 %v144
    %v146 = vpop.xlane.xlu0 %145
    %v148 = vlaneseq
    %v149 = vand.u32 %v148, 127
    %v150 = vlaneseq
    %v151 = vshrl.u32 %v150, 7
    %v152 = vsub.s32 %v149, %v151
    %v153 = vrot.slane %v146, %v152
    %vm154 = vcmask 1042434
    %v155 = vsel %vm154, %v153, %v153
    %vm156 = vcmask 1043459
    %v157 = vsel %vm156, %v153, %v155
    %vm158 = vcmask 1044484
    %v159 = vsel %vm158, %v153, %v157
    %vm160 = vcmask 1045509
    %v161 = vsel %vm160, %v153, %v159
    %vm162 = vcmask 1046534
    %v163 = vsel %vm162, %v153, %v161
    %vm164 = vcmask 1047559
    %v165 = vsel %vm164, %v153, %v163
    %v167 = vsub.f32 %v134, %v165
    %v168 = vmul.f32 %v167, 20.0
    %v169 = vmax.f32 %v168, 0.0
    %v170 = vand.u32 2147483647, %v168
    %v171 = vsub.f32 0.0, %v170
    %v172 = vmul.f32 %v171, 1.442695
    %v173 = vpow.pop %v172
    %v174 = vadd.f32 %v173, 1.0
    %v175 = vlog2.pop %v174
    %v176 = vmul.f32 %v175, 0.6931472
    %v177 = vadd.f32 %v169, %v176
    %vm178 = vcmask 64512
    %v179 = vsel %vm178, %v177, 0.0
    %180 = vadd.xlane.f32.xlu0 %v179
    %v181 = vpop.xlane.xlu0 %180
    %v182 = vrot.slane %v181, 4
    %v183 = vadd.f32 %v181, %v182
    %v184 = vrot.slane %v183, 2
    %v185 = vadd.f32 %v183, %v184
    %v186 = vrot.slane %v185, 1
    %v187 = vadd.f32 %v185, %v186
    %s188 = vtos %v187
    %v189 = vsub.f32 %v134, %v142
    %v190 = vmul.f32 %v189, 20.0
    %v191 = vmax.f32 %v190, 0.0
    %v192 = vand.u32 2147483647, %v190
    %v193 = vsub.f32 0.0, %v192
    %v194 = vmul.f32 %v193, 1.442695
    %v195 = vpow.pop %v194
    %v196 = vadd.f32 %v195, 1.0
    %v197 = vlog2.pop %v196
    %v198 = vmul.f32 %v197, 0.6931472
    %v199 = vadd.f32 %v191, %v198
    %v200 = vsel %vm178, %v199, 0.0
    %201 = vadd.xlane.f32.xlu0 %v200
    %v202 = vpop.xlane.xlu0 %201
    %v203 = vrot.slane %v202, 4
    %v204 = vadd.f32 %v202, %v203
    %v205 = vrot.slane %v204, 2
    %v206 = vadd.f32 %v204, %v205
    %v207 = vrot.slane %v206, 1
    %v208 = vadd.f32 %v206, %v207
    %s209 = vtos %v208
    %v210 = vsel %vm178, %v134, 0.0
    %211 = vadd.xlane.f32.xlu0 %v210
    %v212 = vpop.xlane.xlu0 %211
    %v213 = vrot.slane %v212, 4
    %v214 = vadd.f32 %v212, %v213
    %v215 = vrot.slane %v214, 2
    %v216 = vadd.f32 %v214, %v215
    %v217 = vrot.slane %v216, 1
    %v218 = vadd.f32 %v216, %v217
    %s219 = vtos %v218
    %vm220 = vcmask 7168
    %v221 = vsel %vm220, %v142, 0.0
    %222 = vadd.xlane.f32.xlu0 %v221
    %v223 = vpop.xlane.xlu0 %222
    %v224 = vrot.slane %v223, 4
    %v225 = vadd.f32 %v223, %v224
    %v226 = vrot.slane %v225, 2
    %v227 = vadd.f32 %v225, %v226
    %v228 = vrot.slane %v227, 1
    %v229 = vadd.f32 %v227, %v228
    %s230 = vtos %v229
    %s231 = scalar_select %p53, %s230, 0.0
    %vm232 = vcmp.eq.s32.totalorder %v149, 0
    %v233 = vstv %s188
    %v234 = vsel %vm232, %v233, 0.0
    %vm235 = vcmp.eq.s32.totalorder %v149, 1
    %v236 = vstv %s209
    %v237 = vsel %vm235, %v236, 0.0
    %v238 = vadd.f32 %v234, %v237
    %vm239 = vcmp.eq.s32.totalorder %v149, 2
    %v240 = vstv %s219
    %v241 = vsel %vm239, %v240, 0.0
    %v242 = vadd.f32 %v238, %v241
    %vm243 = vcmp.eq.s32.totalorder %v149, 3
    %v244 = vstv %s231
    %v245 = vsel %vm243, %v244, 0.0
    %v246 = vadd.f32 %v242, %v245
    %v247 = vld [vmem:[#allocation8] sm:$0x1]
    %v248 = vadd.f32 %v247, %v246
    %249 = vst [vmem:[#allocation8] sm:$0x1] %v248
    // Predicated region
    $region34: #{tpu_custom_call.1} parent=1 // pred_check
      _
    $region35: #{tpu_custom_call.1} parent=1 // pred_check_branch
      %251 = sbr.rel (0) target = $region37
    $region36: #{tpu_custom_call.1} parent=1 // pred_region
      %s253 = ssub.s32 16, 16
      %254 = vsyncadd [#allocation4], %s253
      %s256 = sshll.u32 [#allocation8], 4
      %s257 = int_to_ptr.vmem [resolvable:$true] %s256
      %259 = dma.vmem_to_hbm [thread:$0]  %s257, 16, %s4, [#allocation4]
    $region37: #{tpu_custom_call.1} parent=1 // pred_fallthru
      _
    // Predicated region
    $region38: #{tpu_custom_call.1} parent=1 // pred_check
      _
    $region39: #{tpu_custom_call.1} parent=1 // pred_check_branch
      %261 = sbr.rel (0) target = $region41
    $region40: #{tpu_custom_call.1} parent=1 // pred_region
      %262 = dma.done [#allocation4], 16
    $region41: #{tpu_custom_call.1} parent=1 // pred_fallthru
      _
    %263 = vsyncpa [#allocation3], 1
    %264 = vsyncpa [#allocation6], 1
    %265 = vsyncpa [#allocation4], 1

</llo_original>
